<compile_context>
chip_gen: v5e
topology: v5e:2x2
jax: 0.10.0
libtpu: 0.0.40
codegen_flags: <defaults>
</compile_context>

<pallas_src>
import functools

import jax
import jax.numpy as jnp
from jax.experimental import pallas as pl
from jax.experimental.pallas import tpu as pltpu

MODEL_DIM = 128
NUM_HEADS = 4
FFN_DIM = 256
BATCH = 2
SEQ = 8
LN_EPS = 1e-5

# Whole-array-in-VMEM block spec (no grid -> kernel runs once on full arrays).
_VMEM = pl.BlockSpec(memory_space=pltpu.MemorySpace.VMEM)


# ---------------------------------------------------------------------------
# Kernel 1: packed K|V|Q projection   y = x @ Wkvq + bkvq
# ---------------------------------------------------------------------------
def _qkv_kernel(x_ref, w_ref, b_ref, o_ref):
    y = jnp.dot(x_ref[...], w_ref[...], preferred_element_type=jnp.float32)
    o_ref[...] = (y + b_ref[...]).astype(o_ref.dtype)


def qkv_projection(x, w, b):
    M = x.shape[0]
    N = w.shape[1]
    return pl.pallas_call(
        _qkv_kernel,
        out_shape=jax.ShapeDtypeStruct((M, N), x.dtype),
        in_specs=[_VMEM, _VMEM, _VMEM],
        out_specs=_VMEM,
    )(x, w, b)


# ---------------------------------------------------------------------------
# Kernel 2: batched scaled dot-product attention over all (batch*head) slices
# ---------------------------------------------------------------------------
def _attention_kernel(q_ref, k_ref, v_ref, ctx_ref, attn_ref):
    q = q_ref[...]          # [BH, L, d]   (scale already folded into Q)
    k = k_ref[...]
    v = v_ref[...]
    # Contract on the last axis directly (no explicit k.T / XLU transpose).
    s = jnp.einsum("bqd,bkd->bqk", q, k, preferred_element_type=jnp.float32)
    s = s - jnp.max(s, axis=-1, keepdims=True)
    e = jnp.exp(s)
    attn = e * pl.reciprocal(jnp.sum(e, axis=-1, keepdims=True), approx=True)
    attn_ref[...] = attn.astype(attn_ref.dtype)
    ctx_ref[...] = jnp.einsum(
        "bqk,bkd->bqd", attn, v,
        preferred_element_type=jnp.float32).astype(ctx_ref.dtype)
    # TODO(synk): attn_mask (masked_fill_ with -inf) not plumbed; the module's
    # default attn_mask=None is what is implemented here.


def attention(q, k, v):
    BH, L, d = q.shape
    return pl.pallas_call(
        _attention_kernel,
        out_shape=(
            jax.ShapeDtypeStruct((BH, L, d), q.dtype),
            jax.ShapeDtypeStruct((BH, L, L), q.dtype),
        ),
        in_specs=[_VMEM, _VMEM, _VMEM],
        out_specs=(_VMEM, _VMEM),
    )(q, k, v)


# ---------------------------------------------------------------------------
# Kernel 3: fused   z = LN1(residual + ctx @ Wf + bf)
#                   out = LN2(z + relu(z @ W1 + b1) @ W2 + b2)
# ---------------------------------------------------------------------------
def _layer_norm(y, gamma, beta, eps):
    mean = jnp.mean(y, axis=-1, keepdims=True)
    var = jnp.mean((y - mean) ** 2, axis=-1, keepdims=True)
    return (y - mean) * jax.lax.rsqrt(var + eps) * gamma + beta


def _mha_out_ffn_kernel(ctx_ref, res_ref, wf_ref, bf_ref, g1_ref, be1_ref,
                        w1_ref, b1_ref, w2_ref, b2_ref, g2_ref, be2_ref,
                        o_ref, *, eps):
    ctx = ctx_ref[...].astype(jnp.float32)
    # MultiHeadAttention tail: linear_final + residual + LayerNorm.
    y = jnp.dot(ctx, wf_ref[...], preferred_element_type=jnp.float32)
    y = y + bf_ref[...] + res_ref[...].astype(jnp.float32)
    z = _layer_norm(y, g1_ref[...], be1_ref[...], eps)
    # PositionalWiseFeedForward (Conv1d k=1 == pointwise linear).
    h = jnp.dot(z, w1_ref[...], preferred_element_type=jnp.float32) + b1_ref[...]
    h = jnp.maximum(h, 0.0)
    f = jnp.dot(h, w2_ref[...], preferred_element_type=jnp.float32) + b2_ref[...]
    o_ref[...] = _layer_norm(z + f, g2_ref[...], be2_ref[...], eps).astype(o_ref.dtype)


def mha_out_and_ffn(ctx, residual, wf, bf, g1, be1, w1, b1, w2, b2, g2, be2):
    M, D = ctx.shape
    kern = functools.partial(_mha_out_ffn_kernel, eps=LN_EPS)
    return pl.pallas_call(
        kern,
        out_shape=jax.ShapeDtypeStruct((M, D), ctx.dtype),
        in_specs=[_VMEM] * 12,
        out_specs=_VMEM,
    )(ctx, residual, wf, bf, g1, be1, w1, b1, w2, b2, g2, be2)


# ---------------------------------------------------------------------------
# Full EncoderLayer forward
# ---------------------------------------------------------------------------
def encoder_layer(params, inputs):
    B, L, D = inputs.shape
    H = NUM_HEADS
    d = D // H

    x2d = inputs.reshape(B * L, D)

    # Reference quirk: scale is computed after the head view, so
    # key.size(-1) == dim_per_head  ->  scale = (dim_per_head // num_heads)**-0.5
    scale = float(d // H) ** (-0.5)

    # Pack K | V | Q into one [D, 3D] matmul; fold `scale` into the Q weight
    # and bias so the attention kernel needs no score multiply.
    wqkv = jnp.concatenate(
        [params["wk"], params["wv"], params["wq"] * scale], axis=1)
    bqkv = jnp.concatenate(
        [params["bk"], params["bv"], params["bq"] * scale], axis=1)

    kvq = qkv_projection(x2d, wqkv, bqkv)            # [B*L, 3D]
    k2d = kvq[:, :D]
    v2d = kvq[:, D:2 * D]
    q2d = kvq[:, 2 * D:]

    # Same row-major reshape as PyTorch's .view(B*num_heads, -1, dim_per_head)
    # on the contiguous projection outputs (head/sequence interleave quirk
    # preserved exactly).
    kh = k2d.reshape(B * H, -1, d)
    vh = v2d.reshape(B * H, -1, d)
    qh = q2d.reshape(B * H, -1, d)

    context, attn = attention(qh, kh, vh)
    ctx2d = context.reshape(B * L, D)                # == .view(B, -1, D)

    out2d = mha_out_and_ffn(
        ctx2d, x2d,
        params["wf"], params["bf"], params["ln1_g"], params["ln1_b"],
        params["w1"], params["b1"], params["w2"], params["b2"],
        params["ln2_g"], params["ln2_b"])

    return out2d.reshape(B, L, D), attn


def init_params(key, D, F):
    ks = jax.random.split(key, 8)
    w = lambda k, shape, s=0.05: (jax.random.normal(k, shape, jnp.float32) * s)
    return {
        "wk": w(ks[0], (D, D)), "bk": jnp.zeros((1, D), jnp.float32),
        "wv": w(ks[1], (D, D)), "bv": jnp.zeros((1, D), jnp.float32),
        "wq": w(ks[2], (D, D)), "bq": jnp.zeros((1, D), jnp.float32),
        "wf": w(ks[3], (D, D)), "bf": w(ks[4], (1, D), 0.01),
        "ln1_g": jnp.ones((1, D), jnp.float32),
        "ln1_b": jnp.zeros((1, D), jnp.float32),
        # Conv1d(k=1) weights stored pre-transposed: [in, out]
        "w1": w(ks[5], (D, F)), "b1": w(ks[6], (1, F), 0.01),
        "w2": w(ks[7], (F, D)), "b2": jnp.zeros((1, D), jnp.float32),
        "ln2_g": jnp.ones((1, D), jnp.float32),
        "ln2_b": jnp.zeros((1, D), jnp.float32),
    }


# Pure-JAX reference (same PyTorch-faithful math) for a correctness check.
def _reference(params, inputs):
    B, L, D = inputs.shape
    H, d = NUM_HEADS, D // NUM_HEADS
    x2d = inputs.reshape(B * L, D)
    k = x2d @ params["wk"] + params["bk"]
    v = x2d @ params["wv"] + params["bv"]
    q = x2d @ params["wq"] + params["bq"]
    kh = k.reshape(B * H, -1, d)
    vh = v.reshape(B * H, -1, d)
    qh = q.reshape(B * H, -1, d)
    scale = float(d // H) ** (-0.5)
    s = jnp.einsum("bqd,bkd->bqk", qh, kh) * scale
    attn = jax.nn.softmax(s, axis=-1)
    ctx = jnp.einsum("bqk,bkd->bqd", attn, vh).reshape(B * L, D)
    y = ctx @ params["wf"] + params["bf"] + x2d
    z = _layer_norm(y, params["ln1_g"], params["ln1_b"], LN_EPS)
    h = jnp.maximum(z @ params["w1"] + params["b1"], 0.0)
    f = z + h @ params["w2"] + params["b2"]
    out = _layer_norm(f, params["ln2_g"], params["ln2_b"], LN_EPS)
    return out.reshape(B, L, D), attn


if __name__ == "__main__":
    key = jax.random.PRNGKey(0)
    pkey, xkey = jax.random.split(key)
    params = init_params(pkey, MODEL_DIM, FFN_DIM)
    x = jax.random.normal(xkey, (BATCH, SEQ, MODEL_DIM), jnp.float32)

    out, attn = jax.jit(encoder_layer)(params, x)
    jax.block_until_ready((out, attn))

    assert out.shape == (BATCH, SEQ, MODEL_DIM)
    assert attn.shape == (BATCH * NUM_HEADS, SEQ, SEQ)
    assert bool(jnp.all(jnp.isfinite(out))) and bool(jnp.all(jnp.isfinite(attn)))

    ref_out, ref_attn = _reference(params, x)
    assert bool(jnp.allclose(out, ref_out, rtol=2e-2, atol=2e-2))
    assert bool(jnp.allclose(attn, ref_attn, rtol=2e-2, atol=2e-2))

    print("KERNEL_OK")
</pallas_src>

<mosaic_0001>
module attributes {stable_mosaic.version = 11 : i64} {
  func.func @_mha_out_ffn_kernel(%arg0: memref<16x128xf32, #tpu.memory_space<vmem>>, %arg1: memref<16x128xf32, #tpu.memory_space<vmem>>, %arg2: memref<128x128xf32, #tpu.memory_space<vmem>>, %arg3: memref<1x128xf32, #tpu.memory_space<vmem>>, %arg4: memref<1x128xf32, #tpu.memory_space<vmem>>, %arg5: memref<1x128xf32, #tpu.memory_space<vmem>>, %arg6: memref<128x256xf32, #tpu.memory_space<vmem>>, %arg7: memref<1x256xf32, #tpu.memory_space<vmem>>, %arg8: memref<256x128xf32, #tpu.memory_space<vmem>>, %arg9: memref<1x128xf32, #tpu.memory_space<vmem>>, %arg10: memref<1x128xf32, #tpu.memory_space<vmem>>, %arg11: memref<1x128xf32, #tpu.memory_space<vmem>>, %arg12: memref<16x128xf32, #tpu.memory_space<vmem>>) attributes {dimension_semantics = [], scalar_prefetch = 0 : i64, scratch_operands = 0 : i64, tpu.core_type = #tpu.core_type<tc>} {
    %c0 = arith.constant 0 : index
    %c0_0 = arith.constant 0 : index
    %0 = vector.load %arg0[%c0, %c0_0] : memref<16x128xf32, #tpu.memory_space<vmem>>, vector<16x128xf32>
    %c0_1 = arith.constant 0 : index
    %c0_2 = arith.constant 0 : index
    %1 = vector.load %arg2[%c0_1, %c0_2] : memref<128x128xf32, #tpu.memory_space<vmem>>, vector<128x128xf32>
    %cst = arith.constant dense<0.000000e+00> : vector<16x128xf32>
    %2 = tpu.matmul %0, %1, %cst {dimension_numbers = #tpu.dot_dimension_numbers<[1], [0], [0], [1], [0, 0, 1, 1], [], []>} : vector<16x128xf32>, vector<128x128xf32>, vector<16x128xf32> -> vector<16x128xf32>
    %c0_3 = arith.constant 0 : index
    %c0_4 = arith.constant 0 : index
    %3 = vector.load %arg3[%c0_3, %c0_4] : memref<1x128xf32, #tpu.memory_space<vmem>>, vector<1x128xf32>
    %4 = vector.broadcast %3 : vector<1x128xf32> to vector<16x128xf32>
    %5 = arith.addf %2, %4 : vector<16x128xf32>
    %c0_5 = arith.constant 0 : index
    %c0_6 = arith.constant 0 : index
    %6 = vector.load %arg1[%c0_5, %c0_6] : memref<16x128xf32, #tpu.memory_space<vmem>>, vector<16x128xf32>
    %7 = arith.addf %5, %6 : vector<16x128xf32>
    %c0_7 = arith.constant 0 : index
    %c0_8 = arith.constant 0 : index
    %8 = vector.load %arg4[%c0_7, %c0_8] : memref<1x128xf32, #tpu.memory_space<vmem>>, vector<1x128xf32>
    %c0_9 = arith.constant 0 : index
    %c0_10 = arith.constant 0 : index
    %9 = vector.load %arg5[%c0_9, %c0_10] : memref<1x128xf32, #tpu.memory_space<vmem>>, vector<1x128xf32>
    %cst_11 = arith.constant dense<0.000000e+00> : vector<16xf32>
    %10 = vector.multi_reduction <add>, %7, %cst_11 [1] : vector<16x128xf32> to vector<16xf32>
    %11 = vector.shape_cast %10 : vector<16xf32> to vector<16x1xf32>
    %cst_12 = arith.constant 1.280000e+02 : f32
    %12 = vector.broadcast %cst_12 : f32 to vector<16x1xf32>
    %13 = arith.divf %11, %12 : vector<16x1xf32>
    %14 = vector.broadcast %13 : vector<16x1xf32> to vector<16x128xf32>
    %15 = arith.subf %7, %14 : vector<16x128xf32>
    %16 = arith.mulf %15, %15 : vector<16x128xf32>
    %cst_13 = arith.constant dense<0.000000e+00> : vector<16xf32>
    %17 = vector.multi_reduction <add>, %16, %cst_13 [1] : vector<16x128xf32> to vector<16xf32>
    %18 = vector.shape_cast %17 : vector<16xf32> to vector<16x1xf32>
    %cst_14 = arith.constant 1.280000e+02 : f32
    %19 = vector.broadcast %cst_14 : f32 to vector<16x1xf32>
    %20 = arith.divf %18, %19 : vector<16x1xf32>
    %21 = vector.broadcast %13 : vector<16x1xf32> to vector<16x128xf32>
    %22 = arith.subf %7, %21 : vector<16x128xf32>
    %cst_15 = arith.constant 9.99999974E-6 : f32
    %23 = vector.broadcast %cst_15 : f32 to vector<16x1xf32>
    %24 = arith.addf %20, %23 : vector<16x1xf32>
    %25 = math.rsqrt %24 : vector<16x1xf32>
    %26 = vector.broadcast %25 : vector<16x1xf32> to vector<16x128xf32>
    %27 = arith.mulf %22, %26 : vector<16x128xf32>
    %28 = vector.broadcast %8 : vector<1x128xf32> to vector<16x128xf32>
    %29 = arith.mulf %27, %28 : vector<16x128xf32>
    %30 = vector.broadcast %9 : vector<1x128xf32> to vector<16x128xf32>
    %31 = arith.addf %29, %30 : vector<16x128xf32>
    %c0_16 = arith.constant 0 : index
    %c0_17 = arith.constant 0 : index
    %32 = vector.load %arg6[%c0_16, %c0_17] : memref<128x256xf32, #tpu.memory_space<vmem>>, vector<128x256xf32>
    %cst_18 = arith.constant dense<0.000000e+00> : vector<16x256xf32>
    %33 = tpu.matmul %31, %32, %cst_18 {dimension_numbers = #tpu.dot_dimension_numbers<[1], [0], [0], [1], [0, 0, 1, 1], [], []>} : vector<16x128xf32>, vector<128x256xf32>, vector<16x256xf32> -> vector<16x256xf32>
    %c0_19 = arith.constant 0 : index
    %c0_20 = arith.constant 0 : index
    %34 = vector.load %arg7[%c0_19, %c0_20] : memref<1x256xf32, #tpu.memory_space<vmem>>, vector<1x256xf32>
    %35 = vector.broadcast %34 : vector<1x256xf32> to vector<16x256xf32>
    %36 = arith.addf %33, %35 : vector<16x256xf32>
    %cst_21 = arith.constant 0.000000e+00 : f32
    %37 = vector.broadcast %cst_21 : f32 to vector<16x256xf32>
    %38 = arith.maximumf %36, %37 : vector<16x256xf32>
    %c0_22 = arith.constant 0 : index
    %c0_23 = arith.constant 0 : index
    %39 = vector.load %arg8[%c0_22, %c0_23] : memref<256x128xf32, #tpu.memory_space<vmem>>, vector<256x128xf32>
    %cst_24 = arith.constant dense<0.000000e+00> : vector<16x128xf32>
    %40 = tpu.matmul %38, %39, %cst_24 {dimension_numbers = #tpu.dot_dimension_numbers<[1], [0], [0], [1], [0, 0, 1, 1], [], []>} : vector<16x256xf32>, vector<256x128xf32>, vector<16x128xf32> -> vector<16x128xf32>
    %c0_25 = arith.constant 0 : index
    %c0_26 = arith.constant 0 : index
    %41 = vector.load %arg9[%c0_25, %c0_26] : memref<1x128xf32, #tpu.memory_space<vmem>>, vector<1x128xf32>
    %42 = vector.broadcast %41 : vector<1x128xf32> to vector<16x128xf32>
    %43 = arith.addf %40, %42 : vector<16x128xf32>
    %44 = arith.addf %31, %43 : vector<16x128xf32>
    %c0_27 = arith.constant 0 : index
    %c0_28 = arith.constant 0 : index
    %45 = vector.load %arg10[%c0_27, %c0_28] : memref<1x128xf32, #tpu.memory_space<vmem>>, vector<1x128xf32>
    %c0_29 = arith.constant 0 : index
    %c0_30 = arith.constant 0 : index
    %46 = vector.load %arg11[%c0_29, %c0_30] : memref<1x128xf32, #tpu.memory_space<vmem>>, vector<1x128xf32>
    %cst_31 = arith.constant dense<0.000000e+00> : vector<16xf32>
    %47 = vector.multi_reduction <add>, %44, %cst_31 [1] : vector<16x128xf32> to vector<16xf32>
    %48 = vector.shape_cast %47 : vector<16xf32> to vector<16x1xf32>
    %cst_32 = arith.constant 1.280000e+02 : f32
    %49 = vector.broadcast %cst_32 : f32 to vector<16x1xf32>
    %50 = arith.divf %48, %49 : vector<16x1xf32>
    %51 = vector.broadcast %50 : vector<16x1xf32> to vector<16x128xf32>
    %52 = arith.subf %44, %51 : vector<16x128xf32>
    %53 = arith.mulf %52, %52 : vector<16x128xf32>
    %cst_33 = arith.constant dense<0.000000e+00> : vector<16xf32>
    %54 = vector.multi_reduction <add>, %53, %cst_33 [1] : vector<16x128xf32> to vector<16xf32>
    %55 = vector.shape_cast %54 : vector<16xf32> to vector<16x1xf32>
    %cst_34 = arith.constant 1.280000e+02 : f32
    %56 = vector.broadcast %cst_34 : f32 to vector<16x1xf32>
    %57 = arith.divf %55, %56 : vector<16x1xf32>
    %58 = vector.broadcast %50 : vector<16x1xf32> to vector<16x128xf32>
    %59 = arith.subf %44, %58 : vector<16x128xf32>
    %cst_35 = arith.constant 9.99999974E-6 : f32
    %60 = vector.broadcast %cst_35 : f32 to vector<16x1xf32>
    %61 = arith.addf %57, %60 : vector<16x1xf32>
    %62 = math.rsqrt %61 : vector<16x1xf32>
    %63 = vector.broadcast %62 : vector<16x1xf32> to vector<16x128xf32>
    %64 = arith.mulf %59, %63 : vector<16x128xf32>
    %65 = vector.broadcast %45 : vector<1x128xf32> to vector<16x128xf32>
    %66 = arith.mulf %64, %65 : vector<16x128xf32>
    %67 = vector.broadcast %46 : vector<1x128xf32> to vector<16x128xf32>
    %68 = arith.addf %66, %67 : vector<16x128xf32>
    %c0_36 = arith.constant 0 : index
    %c0_37 = arith.constant 0 : index
    %69 = vector.load %arg12[%c0_36, %c0_37] : memref<16x128xf32, #tpu.memory_space<vmem>>, vector<16x128xf32>
    tpu.vector_store %arg12[%c0_36, %c0_37], %68 {strides = array<i32>} : memref<16x128xf32, #tpu.memory_space<vmem>>, vector<16x128xf32>,
    return
  }
}

module attributes {stable_mosaic.version = 11 : i64} {
  func.func @_qkv_kernel(%arg0: memref<16x128xf32, #tpu.memory_space<vmem>>, %arg1: memref<128x384xf32, #tpu.memory_space<vmem>>, %arg2: memref<1x384xf32, #tpu.memory_space<vmem>>, %arg3: memref<16x384xf32, #tpu.memory_space<vmem>>) attributes {dimension_semantics = [], scalar_prefetch = 0 : i64, scratch_operands = 0 : i64, tpu.core_type = #tpu.core_type<tc>} {
    %c0 = arith.constant 0 : index
    %c0_0 = arith.constant 0 : index
    %0 = vector.load %arg0[%c0, %c0_0] : memref<16x128xf32, #tpu.memory_space<vmem>>, vector<16x128xf32>
    %c0_1 = arith.constant 0 : index
    %c0_2 = arith.constant 0 : index
    %1 = vector.load %arg1[%c0_1, %c0_2] : memref<128x384xf32, #tpu.memory_space<vmem>>, vector<128x384xf32>
    %cst = arith.constant dense<0.000000e+00> : vector<16x384xf32>
    %2 = tpu.matmul %0, %1, %cst {dimension_numbers = #tpu.dot_dimension_numbers<[1], [0], [0], [1], [0, 0, 1, 1], [], []>} : vector<16x128xf32>, vector<128x384xf32>, vector<16x384xf32> -> vector<16x384xf32>
    %c0_3 = arith.constant 0 : index
    %c0_4 = arith.constant 0 : index
    %3 = vector.load %arg2[%c0_3, %c0_4] : memref<1x384xf32, #tpu.memory_space<vmem>>, vector<1x384xf32>
    %4 = vector.broadcast %3 : vector<1x384xf32> to vector<16x384xf32>
    %5 = arith.addf %2, %4 : vector<16x384xf32>
    %c0_5 = arith.constant 0 : index
    %c0_6 = arith.constant 0 : index
    %6 = vector.load %arg3[%c0_5, %c0_6] : memref<16x384xf32, #tpu.memory_space<vmem>>, vector<16x384xf32>
    tpu.vector_store %arg3[%c0_5, %c0_6], %5 {strides = array<i32>} : memref<16x384xf32, #tpu.memory_space<vmem>>, vector<16x384xf32>,
    return
  }
}

module attributes {stable_mosaic.version = 11 : i64} {
  func.func @_attention_kernel(%arg0: memref<8x8x32xf32, #tpu.memory_space<vmem>>, %arg1: memref<8x8x32xf32, #tpu.memory_space<vmem>>, %arg2: memref<8x8x32xf32, #tpu.memory_space<vmem>>, %arg3: memref<8x8x32xf32, #tpu.memory_space<vmem>>, %arg4: memref<8x8x8xf32, #tpu.memory_space<vmem>>) attributes {dimension_semantics = [], scalar_prefetch = 0 : i64, scratch_operands = 0 : i64, tpu.core_type = #tpu.core_type<tc>} {
    %c0 = arith.constant 0 : index
    %c0_0 = arith.constant 0 : index
    %c0_1 = arith.constant 0 : index
    %0 = vector.load %arg0[%c0, %c0_0, %c0_1] : memref<8x8x32xf32, #tpu.memory_space<vmem>>, vector<8x8x32xf32>
    %c0_2 = arith.constant 0 : index
    %c0_3 = arith.constant 0 : index
    %c0_4 = arith.constant 0 : index
    %1 = vector.load %arg1[%c0_2, %c0_3, %c0_4] : memref<8x8x32xf32, #tpu.memory_space<vmem>>, vector<8x8x32xf32>
    %c0_5 = arith.constant 0 : index
    %c0_6 = arith.constant 0 : index
    %c0_7 = arith.constant 0 : index
    %2 = vector.load %arg2[%c0_5, %c0_6, %c0_7] : memref<8x8x32xf32, #tpu.memory_space<vmem>>, vector<8x8x32xf32>
    "tpu.trace_start"() <{level = 10 : i32, message = "bqd,bkd->bqk"}> : () -> ()
    %cst = arith.constant dense<0.000000e+00> : vector<8x8x8xf32>
    %3 = tpu.matmul %0, %1, %cst {dimension_numbers = #tpu.dot_dimension_numbers<[2], [2], [1], [1], [0, 0, 0, 1, 1, 1], [0], [0]>} : vector<8x8x32xf32>, vector<8x8x32xf32>, vector<8x8x8xf32> -> vector<8x8x8xf32>
    "tpu.trace_stop"() : () -> ()
    %cst_8 = arith.constant dense<0xFF800000> : vector<8x8xf32>
    %4 = vector.multi_reduction <maximumf>, %3, %cst_8 [2] : vector<8x8x8xf32> to vector<8x8xf32>
    %5 = vector.shape_cast %4 : vector<8x8xf32> to vector<8x8x1xf32>
    %6 = vector.broadcast %5 : vector<8x8x1xf32> to vector<8x8x8xf32>
    %7 = arith.subf %3, %6 : vector<8x8x8xf32>
    %8 = math.exp %7 : vector<8x8x8xf32>
    %cst_9 = arith.constant dense<0.000000e+00> : vector<8x8xf32>
    %9 = vector.multi_reduction <add>, %8, %cst_9 [2] : vector<8x8x8xf32> to vector<8x8xf32>
    %10 = vector.shape_cast %9 : vector<8x8xf32> to vector<8x8x1xf32>
    %11 = tpu.reciprocal %10 {approx = true} : vector<8x8x1xf32> -> vector<8x8x1xf32>
    %12 = vector.broadcast %11 : vector<8x8x1xf32> to vector<8x8x8xf32>
    %13 = arith.mulf %8, %12 : vector<8x8x8xf32>
    %c0_10 = arith.constant 0 : index
    %c0_11 = arith.constant 0 : index
    %c0_12 = arith.constant 0 : index
    %14 = vector.load %arg4[%c0_10, %c0_11, %c0_12] : memref<8x8x8xf32, #tpu.memory_space<vmem>>, vector<8x8x8xf32>
    tpu.vector_store %arg4[%c0_10, %c0_11, %c0_12], %13 {strides = array<i32>} : memref<8x8x8xf32, #tpu.memory_space<vmem>>, vector<8x8x8xf32>,
    "tpu.trace_start"() <{level = 10 : i32, message = "bqk,bkd->bqd"}> : () -> ()
    %cst_13 = arith.constant dense<0.000000e+00> : vector<8x8x32xf32>
    %15 = tpu.matmul %13, %2, %cst_13 {dimension_numbers = #tpu.dot_dimension_numbers<[2], [1], [1], [2], [0, 0, 0, 1, 1, 2], [0], [0]>} : vector<8x8x8xf32>, vector<8x8x32xf32>, vector<8x8x32xf32> -> vector<8x8x32xf32>
    "tpu.trace_stop"() : () -> ()
    %c0_14 = arith.constant 0 : index
    %c0_15 = arith.constant 0 : index
    %c0_16 = arith.constant 0 : index
    %16 = vector.load %arg3[%c0_14, %c0_15, %c0_16] : memref<8x8x32xf32, #tpu.memory_space<vmem>>, vector<8x8x32xf32>
    tpu.vector_store %arg3[%c0_14, %c0_15, %c0_16], %15 {strides = array<i32>} : memref<8x8x32xf32, #tpu.memory_space<vmem>>, vector<8x8x32xf32>,
    return
  }
}

</mosaic_0001>

<llo_original>
// kernel: encoder_layer.5
$region0: #{encoder_layer.5}
  #allocation0 [shape = 'u32[]', space=smem, size = 0x4, offset = 0x4, fixed_abs, tag = 'smem constant byte address 0x4 - core index']
  #allocation1 [shape = 'u32[72,128]{1,0:T(1,128)}', space=vmem, size = 0x9000, scoped, tag = 'internal scratch']
  %s0 = inlined_call_operand.vmem [shape: f32[16,128], index: 0, kind: input, shape index: {}]
  %s1 = inlined_call_operand.vmem [shape: f32[16,128], index: 1, kind: input, shape index: {}]
  %s2 = inlined_call_operand.vmem [shape: f32[128,128], index: 2, kind: input, shape index: {}]
  %s3 = inlined_call_operand.vmem [shape: f32[1,128], index: 3, kind: input, shape index: {}]
  %s4 = inlined_call_operand.vmem [shape: f32[1,128], index: 4, kind: input, shape index: {}]
  %s5 = inlined_call_operand.vmem [shape: f32[1,128], index: 5, kind: input, shape index: {}]
  %s6 = inlined_call_operand.vmem [shape: f32[128,256], index: 6, kind: input, shape index: {}]
  %s7 = inlined_call_operand.vmem [shape: f32[1,256], index: 7, kind: input, shape index: {}]
  %s8 = inlined_call_operand.vmem [shape: f32[256,128], index: 8, kind: input, shape index: {}]
  %s9 = inlined_call_operand.vmem [shape: f32[1,128], index: 9, kind: input, shape index: {}]
  %s10 = inlined_call_operand.vmem [shape: f32[1,128], index: 10, kind: input, shape index: {}]
  %s11 = inlined_call_operand.vmem [shape: f32[1,128], index: 11, kind: input, shape index: {}]
  %s12 = inlined_call_operand.hbm [shape: f32[16,128], index: 12, kind: output, shape index: {}]
  %s13 = sld [smem:[#allocation0]]
  $region58: #{encoder_layer.5} parent=0
    _
  %s15 = ssub.s32 1, %s13
  %s16 = scalar_select 0, %s15, %s13
  $region1: #{encoder_layer.5} parent=0
    #allocation2 [shape = 'u8[8192]{0}', space=vmem, size = 0x2000, scoped, tag = 'output window, operand 0, single buffered']
    #allocation3 [shape = 's32[1]{0}', space=sflag, size = 0x4, scoped, tag = 'scoped memory for encoder_layer.5']
    %17 = vsyncpa [#allocation3], 0
    // Predicated region
    $region2: #{encoder_layer.5} parent=1 // pred_check
      _
    $region3: #{encoder_layer.5} parent=1 // pred_check_branch
      %19 = sbr.rel (0) target = $region5
    $region4: #{encoder_layer.5} parent=1 // pred_region
      _
    $region5: #{encoder_layer.5} parent=1 // pred_fallthru
      _
    // Predicated region
    $region6: #{encoder_layer.5} parent=1 // pred_check
      _
    $region7: #{encoder_layer.5} parent=1 // pred_check_branch
      %21 = sbr.rel (0) target = $region9
    $region8: #{encoder_layer.5} parent=1 // pred_region
      _
    $region9: #{encoder_layer.5} parent=1 // pred_fallthru
      _
    // Predicated region
    $region10: #{encoder_layer.5} parent=1 // pred_check
      _
    $region11: #{encoder_layer.5} parent=1 // pred_check_branch
      %23 = sbr.rel (0) target = $region13
    $region12: #{encoder_layer.5} parent=1 // pred_region
      _
    $region13: #{encoder_layer.5} parent=1 // pred_fallthru
      _
    // Predicated region
    $region14: #{encoder_layer.5} parent=1 // pred_check
      _
    $region15: #{encoder_layer.5} parent=1 // pred_check_branch
      %25 = sbr.rel (0) target = $region17
    $region16: #{encoder_layer.5} parent=1 // pred_region
      _
    $region17: #{encoder_layer.5} parent=1 // pred_fallthru
      _
    // Predicated region
    $region18: #{encoder_layer.5} parent=1 // pred_check
      _
    $region19: #{encoder_layer.5} parent=1 // pred_check_branch
      %27 = sbr.rel (0) target = $region21
    $region20: #{encoder_layer.5} parent=1 // pred_region
      _
    $region21: #{encoder_layer.5} parent=1 // pred_fallthru
      _
    // Predicated region
    $region22: #{encoder_layer.5} parent=1 // pred_check
      _
    $region23: #{encoder_layer.5} parent=1 // pred_check_branch
      %29 = sbr.rel (0) target = $region25
    $region24: #{encoder_layer.5} parent=1 // pred_region
      _
    $region25: #{encoder_layer.5} parent=1 // pred_fallthru
      _
    // Predicated region
    $region26: #{encoder_layer.5} parent=1 // pred_check
      _
    $region27: #{encoder_layer.5} parent=1 // pred_check_branch
      %31 = sbr.rel (0) target = $region29
    $region28: #{encoder_layer.5} parent=1 // pred_region
      _
    $region29: #{encoder_layer.5} parent=1 // pred_fallthru
      _
    // Predicated region
    $region30: #{encoder_layer.5} parent=1 // pred_check
      _
    $region31: #{encoder_layer.5} parent=1 // pred_check_branch
      %33 = sbr.rel (0) target = $region33
    $region32: #{encoder_layer.5} parent=1 // pred_region
      _
    $region33: #{encoder_layer.5} parent=1 // pred_fallthru
      _
    // Predicated region
    $region34: #{encoder_layer.5} parent=1 // pred_check
      _
    $region35: #{encoder_layer.5} parent=1 // pred_check_branch
      %35 = sbr.rel (0) target = $region37
    $region36: #{encoder_layer.5} parent=1 // pred_region
      _
    $region37: #{encoder_layer.5} parent=1 // pred_fallthru
      _
    // Predicated region
    $region38: #{encoder_layer.5} parent=1 // pred_check
      _
    $region39: #{encoder_layer.5} parent=1 // pred_check_branch
      %37 = sbr.rel (0) target = $region41
    $region40: #{encoder_layer.5} parent=1 // pred_region
      _
    $region41: #{encoder_layer.5} parent=1 // pred_fallthru
      _
    // Predicated region
    $region42: #{encoder_layer.5} parent=1 // pred_check
      _
    $region43: #{encoder_layer.5} parent=1 // pred_check_branch
      %39 = sbr.rel (0) target = $region45
    $region44: #{encoder_layer.5} parent=1 // pred_region
      _
    $region45: #{encoder_layer.5} parent=1 // pred_fallthru
      _
    // Predicated region
    $region46: #{encoder_layer.5} parent=1 // pred_check
      _
    $region47: #{encoder_layer.5} parent=1 // pred_check_branch
      %41 = sbr.rel (0) target = $region49
    $region48: #{encoder_layer.5} parent=1 // pred_region
      _
    $region49: #{encoder_layer.5} parent=1 // pred_fallthru
      _
    %v42 = vld [vmem:[%s0] sm:$0xff]
    %v43 = vld [vmem:[%s0 + $0x8] sm:$0xff]
    %v44 = vld [vmem:[%s2] sm:$0xff]
    %v45 = vld [vmem:[%s2 + $0x8] sm:$0xff]
    %v46 = vld [vmem:[%s2 + $0x10] sm:$0xff]
    %v47 = vld [vmem:[%s2 + $0x18] sm:$0xff]
    %v48 = vld [vmem:[%s2 + $0x20] sm:$0xff]
    %v49 = vld [vmem:[%s2 + $0x28] sm:$0xff]
    %v50 = vld [vmem:[%s2 + $0x30] sm:$0xff]
    %v51 = vld [vmem:[%s2 + $0x38] sm:$0xff]
    %v52 = vld [vmem:[%s2 + $0x40] sm:$0xff]
    %v53 = vld [vmem:[%s2 + $0x48] sm:$0xff]
    %v54 = vld [vmem:[%s2 + $0x50] sm:$0xff]
    %v55 = vld [vmem:[%s2 + $0x58] sm:$0xff]
    %v56 = vld [vmem:[%s2 + $0x60] sm:$0xff]
    %v57 = vld [vmem:[%s2 + $0x68] sm:$0xff]
    %v58 = vld [vmem:[%s2 + $0x70] sm:$0xff]
    %v59 = vld [vmem:[%s2 + $0x78] sm:$0xff]
    %v60 = vld [vmem:[%s3] sm:$0x1]
    %v62 = vperm.slane %v60, 0
    %64 = vmatpush.msra.mxu0 %v59
    %65 = vmatpush.msra.mxu0 %v58
    %66 = vmatpush.msra.mxu0 %v57
    %67 = vmatpush.msra.mxu0 %v56
    %68 = vmatpush.msra.mxu0 %v55
    %69 = vmatpush.msra.mxu0 %v54
    %70 = vmatpush.msra.mxu0 %v53
    %71 = vmatpush.msra.mxu0 %v52
    %72 = vmatpush.msra.mxu0 %v51
    %73 = vmatpush.msra.mxu0 %v50
    %74 = vmatpush.msra.mxu0 %v49
    %75 = vmatpush.msra.mxu0 %v48
    %76 = vmatpush.msra.mxu0 %v47
    %77 = vmatpush.msra.mxu0 %v46
    %78 = vmatpush.msra.mxu0 %v45
    %79 = vmatpush.msra.mxu0 %v44
    %80 = vmatmul.f32.gmra.mxu0 %v42
    %v81 = vpop.f32.mrf.mxu0
    %v82 = vadd.f32 %v62, %v81
    %83 = vmatmul.f32.gmra.mxu0 %v43
    %v84 = vpop.f32.mrf.mxu0
    %v85 = vadd.f32 %v62, %v84
    %86 = vdwg.mxu0
    %v87 = vld [vmem:[%s1] sm:$0xff]
    %v88 = vld [vmem:[%s1 + $0x8] sm:$0xff]
    %v89 = vadd.f32 %v82, %v87
    %v90 = vadd.f32 %v85, %v88
    %v91 = vld [vmem:[%s4] sm:$0x1]
    %v92 = vld [vmem:[%s5] sm:$0x1]
    %93 = vadd.xlane.f32.xlu0 %v89
    %v94 = vpop.xlane.xlu0 %93
    %95 = vadd.xlane.f32.xlu0 %v90
    %v96 = vpop.xlane.xlu0 %95
    %v97 = vrcp.pop 128.0
    %v98 = vmul.f32 128.0, %v97
    %v99 = vsub.f32 1.0, %v98
    %v100 = vmul.f32 %v97, %v99
    %v101 = vadd.f32 %v97, %v100
    %vm102 = vweird.f32 %v97
    %v103 = vsel %vm102, %v97, %v101
    %v104 = vmul.f32 %v94, %v103
    %v105 = vmul.f32 %v96, %v103
    %v106 = vsub.f32 %v89, %v104
    %v107 = vsub.f32 %v90, %v105
    %v108 = vmul.f32 %v106, %v106
    %v109 = vmul.f32 %v107, %v107
    %110 = vadd.xlane.f32.xlu0 %v108
    %v111 = vpop.xlane.xlu0 %110
    %112 = vadd.xlane.f32.xlu0 %v109
    %v113 = vpop.xlane.xlu0 %112
    %v114 = vmul.f32 %v111, %v103
    %v115 = vmul.f32 %v113, %v103
    %v116 = vadd.f32 %v114, 1e-05
    %v117 = vadd.f32 %v115, 1e-05
    %v118 = vrsqrt.pop %v116
    %v119 = vmul.f32 %v118, %v116
    %v120 = vmul.f32 %v119, %v118
    %v121 = vmul.f32 0.5, %v120
    %v122 = vsub.f32 1.5, %v121
    %v123 = vmul.f32 %v118, %v122
    %vm124 = vweird.f32 %v116
    %vm125 = vweird.f32 %v118
    %vm126 = vmor %vm124, %vm125
    %v127 = vsel %vm126, %v118, %v123
    %v128 = vrsqrt.pop %v117
    %v129 = vmul.f32 %v128, %v117
    %v130 = vmul.f32 %v129, %v128
    %v131 = vmul.f32 0.5, %v130
    %v132 = vsub.f32 1.5, %v131
    %v133 = vmul.f32 %v128, %v132
    %vm134 = vweird.f32 %v117
    %vm135 = vweird.f32 %v128
    %vm136 = vmor %vm134, %vm135
    %v137 = vsel %vm136, %v128, %v133
    %v138 = vmul.f32 %v106, %v127
    %v139 = vmul.f32 %v107, %v137
    %v141 = vperm.slane %v91, 0
    %v143 = vmul.f32 %v138, %v141
    %v144 = vmul.f32 %v139, %v141
    %v146 = vperm.slane %v92, 0
    %v148 = vadd.f32 %v143, %v146
    %v149 = vadd.f32 %v144, %v146
    %v150 = vld [vmem:[%s6] sm:$0xff]
    %v151 = vld [vmem:[%s6 + $0x8] sm:$0xff]
    %v152 = vld [vmem:[%s6 + $0x10] sm:$0xff]
    %v153 = vld [vmem:[%s6 + $0x18] sm:$0xff]
    %v154 = vld [vmem:[%s6 + $0x20] sm:$0xff]
    %v155 = vld [vmem:[%s6 + $0x28] sm:$0xff]
    %v156 = vld [vmem:[%s6 + $0x30] sm:$0xff]
    %v157 = vld [vmem:[%s6 + $0x38] sm:$0xff]
    %v158 = vld [vmem:[%s6 + $0x40] sm:$0xff]
    %v159 = vld [vmem:[%s6 + $0x48] sm:$0xff]
    %v160 = vld [vmem:[%s6 + $0x50] sm:$0xff]
    %v161 = vld [vmem:[%s6 + $0x58] sm:$0xff]
    %v162 = vld [vmem:[%s6 + $0x60] sm:$0xff]
    %v163 = vld [vmem:[%s6 + $0x68] sm:$0xff]
    %v164 = vld [vmem:[%s6 + $0x70] sm:$0xff]
    %v165 = vld [vmem:[%s6 + $0x78] sm:$0xff]
    %v166 = vld [vmem:[%s6 + $0x80] sm:$0xff]
    %v167 = vld [vmem:[%s6 + $0x88] sm:$0xff]
    %v168 = vld [vmem:[%s6 + $0x90] sm:$0xff]
    %v169 = vld [vmem:[%s6 + $0x98] sm:$0xff]
    %v170 = vld [vmem:[%s6 + $0xa0] sm:$0xff]
    %v171 = vld [vmem:[%s6 + $0xa8] sm:$0xff]
    %v172 = vld [vmem:[%s6 + $0xb0] sm:$0xff]
    %v173 = vld [vmem:[%s6 + $0xb8] sm:$0xff]
    %v174 = vld [vmem:[%s6 + $0xc0] sm:$0xff]
    %v175 = vld [vmem:[%s6 + $0xc8] sm:$0xff]
    %v176 = vld [vmem:[%s6 + $0xd0] sm:$0xff]
    %v177 = vld [vmem:[%s6 + $0xd8] sm:$0xff]
    %v178 = vld [vmem:[%s6 + $0xe0] sm:$0xff]
    %v179 = vld [vmem:[%s6 + $0xe8] sm:$0xff]
    %v180 = vld [vmem:[%s6 + $0xf0] sm:$0xff]
    %v181 = vld [vmem:[%s6 + $0xf8] sm:$0xff]
    %v182 = vld [vmem:[%s7] sm:$0x3]
    %v184 = vperm.slane %v182, 0
    %v185 = vperm.slane %v182, 1
    %188 = vmatpush.msra.mxu0 %v180
    %189 = vmatpush.msra.mxu0 %v178
    %190 = vmatpush.msra.mxu0 %v176
    %191 = vmatpush.msra.mxu0 %v174
    %192 = vmatpush.msra.mxu0 %v172
    %193 = vmatpush.msra.mxu0 %v170
    %194 = vmatpush.msra.mxu0 %v168
    %195 = vmatpush.msra.mxu0 %v166
    %196 = vmatpush.msra.mxu0 %v164
    %197 = vmatpush.msra.mxu0 %v162
    %198 = vmatpush.msra.mxu0 %v160
    %199 = vmatpush.msra.mxu0 %v158
    %200 = vmatpush.msra.mxu0 %v156
    %201 = vmatpush.msra.mxu0 %v154
    %202 = vmatpush.msra.mxu0 %v152
    %203 = vmatpush.msra.mxu0 %v150
    %204 = vmatmul.f32.gmra.mxu0 %v148
    %v205 = vpop.f32.mrf.mxu0
    %v206 = vadd.f32 %v184, %v205
    %207 = vmatmul.f32.gmra.mxu0 %v149
    %v208 = vpop.f32.mrf.mxu0
    %v209 = vadd.f32 %v184, %v208
    %210 = vdwg.mxu0
    %211 = vmatpush.msra.mxu0 %v181
    %212 = vmatpush.msra.mxu0 %v179
    %213 = vmatpush.msra.mxu0 %v177
    %214 = vmatpush.msra.mxu0 %v175
    %215 = vmatpush.msra.mxu0 %v173
    %216 = vmatpush.msra.mxu0 %v171
    %217 = vmatpush.msra.mxu0 %v169
    %218 = vmatpush.msra.mxu0 %v167
    %219 = vmatpush.msra.mxu0 %v165
    %220 = vmatpush.msra.mxu0 %v163
    %221 = vmatpush.msra.mxu0 %v161
    %222 = vmatpush.msra.mxu0 %v159
    %223 = vmatpush.msra.mxu0 %v157
    %224 = vmatpush.msra.mxu0 %v155
    %225 = vmatpush.msra.mxu0 %v153
    %226 = vmatpush.msra.mxu0 %v151
    %227 = vmatmul.f32.gmra.mxu0 %v148
    %v228 = vpop.f32.mrf.mxu0
    %v229 = vadd.f32 %v185, %v228
    %230 = vmatmul.f32.gmra.mxu0 %v149
    %v231 = vpop.f32.mrf.mxu0
    %v232 = vadd.f32 %v185, %v231
    %233 = vdwg.mxu0
    %v234 = vmax.f32 %v206, 0.0
    %v235 = vmax.f32 %v229, 0.0
    %v236 = vmax.f32 %v209, 0.0
    %v237 = vmax.f32 %v232, 0.0
    %v238 = vld [vmem:[%s8] sm:$0xff]
    %v239 = vld [vmem:[%s8 + $0x8] sm:$0xff]
    %v240 = vld [vmem:[%s8 + $0x10] sm:$0xff]
    %v241 = vld [vmem:[%s8 + $0x18] sm:$0xff]
    %v242 = vld [vmem:[%s8 + $0x20] sm:$0xff]
    %v243 = vld [vmem:[%s8 + $0x28] sm:$0xff]
    %v244 = vld [vmem:[%s8 + $0x30] sm:$0xff]
    %v245 = vld [vmem:[%s8 + $0x38] sm:$0xff]
    %v246 = vld [vmem:[%s8 + $0x40] sm:$0xff]
    %v247 = vld [vmem:[%s8 + $0x48] sm:$0xff]
    %v248 = vld [vmem:[%s8 + $0x50] sm:$0xff]
    %v249 = vld [vmem:[%s8 + $0x58] sm:$0xff]
    %v250 = vld [vmem:[%s8 + $0x60] sm:$0xff]
    %v251 = vld [vmem:[%s8 + $0x68] sm:$0xff]
    %v252 = vld [vmem:[%s8 + $0x70] sm:$0xff]
    %v253 = vld [vmem:[%s8 + $0x78] sm:$0xff]
    %v254 = vld [vmem:[%s8 + $0x80] sm:$0xff]
    %v255 = vld [vmem:[%s8 + $0x88] sm:$0xff]
    %v256 = vld [vmem:[%s8 + $0x90] sm:$0xff]
    %v257 = vld [vmem:[%s8 + $0x98] sm:$0xff]
    %v258 = vld [vmem:[%s8 + $0xa0] sm:$0xff]
    %v259 = vld [vmem:[%s8 + $0xa8] sm:$0xff]
    %v260 = vld [vmem:[%s8 + $0xb0] sm:$0xff]
    %v261 = vld [vmem:[%s8 + $0xb8] sm:$0xff]
    %v262 = vld [vmem:[%s8 + $0xc0] sm:$0xff]
    %v263 = vld [vmem:[%s8 + $0xc8] sm:$0xff]
    %v264 = vld [vmem:[%s8 + $0xd0] sm:$0xff]
    %v265 = vld [vmem:[%s8 + $0xd8] sm:$0xff]
    %v266 = vld [vmem:[%s8 + $0xe0] sm:$0xff]
    %v267 = vld [vmem:[%s8 + $0xe8] sm:$0xff]
    %v268 = vld [vmem:[%s8 + $0xf0] sm:$0xff]
    %v269 = vld [vmem:[%s8 + $0xf8] sm:$0xff]
    %v270 = vld [vmem:[%s9] sm:$0x1]
    %v272 = vperm.slane %v270, 0
    %274 = vmatpush.msra.mxu0 %v253
    %275 = vmatpush.msra.mxu0 %v252
    %276 = vmatpush.msra.mxu0 %v251
    %277 = vmatpush.msra.mxu0 %v250
    %278 = vmatpush.msra.mxu0 %v249
    %279 = vmatpush.msra.mxu0 %v248
    %280 = vmatpush.msra.mxu0 %v247
    %281 = vmatpush.msra.mxu0 %v246
    %282 = vmatpush.msra.mxu0 %v245
    %283 = vmatpush.msra.mxu0 %v244
    %284 = vmatpush.msra.mxu0 %v243
    %285 = vmatpush.msra.mxu0 %v242
    %286 = vmatpush.msra.mxu0 %v241
    %287 = vmatpush.msra.mxu0 %v240
    %288 = vmatpush.msra.mxu0 %v239
    %289 = vmatpush.msra.mxu0 %v238
    %290 = vmatmul.f32.gmra.mxu0 %v234
    %v291 = vpop.f32.mrf.mxu0
    %v292 = vadd.f32 %v272, %v291
    %293 = vmatmul.f32.gmra.mxu0 %v236
    %v294 = vpop.f32.mrf.mxu0
    %v295 = vadd.f32 %v272, %v294
    %296 = vdwg.mxu0
    %297 = vmatpush.msra.mxu0 %v269
    %298 = vmatpush.msra.mxu0 %v268
    %299 = vmatpush.msra.mxu0 %v267
    %300 = vmatpush.msra.mxu0 %v266
    %301 = vmatpush.msra.mxu0 %v265
    %302 = vmatpush.msra.mxu0 %v264
    %303 = vmatpush.msra.mxu0 %v263
    %304 = vmatpush.msra.mxu0 %v262
    %305 = vmatpush.msra.mxu0 %v261
    %306 = vmatpush.msra.mxu0 %v260
    %307 = vmatpush.msra.mxu0 %v259
    %308 = vmatpush.msra.mxu0 %v258
    %309 = vmatpush.msra.mxu0 %v257
    %310 = vmatpush.msra.mxu0 %v256
    %311 = vmatpush.msra.mxu0 %v255
    %312 = vmatpush.msra.mxu0 %v254
    %313 = vmatmul.f32.gmra.mxu0 %v235
    %v314 = vpop.f32.mrf.mxu0
    %v315 = vadd.f32 %v292, %v314
    %316 = vmatmul.f32.gmra.mxu0 %v237
    %v317 = vpop.f32.mrf.mxu0
    %v318 = vadd.f32 %v295, %v317
    %319 = vdwg.mxu0
    %v320 = vadd.f32 %v148, %v315
    %v321 = vadd.f32 %v149, %v318
    %v322 = vld [vmem:[%s10] sm:$0x1]
    %v323 = vld [vmem:[%s11] sm:$0x1]
    %324 = vadd.xlane.f32.xlu0 %v320
    %v325 = vpop.xlane.xlu0 %324
    %326 = vadd.xlane.f32.xlu0 %v321
    %v327 = vpop.xlane.xlu0 %326
    %v328 = vmul.f32 %v325, %v103
    %v329 = vmul.f32 %v327, %v103
    %v330 = vsub.f32 %v320, %v328
    %v331 = vsub.f32 %v321, %v329
    %v332 = vmul.f32 %v330, %v330
    %v333 = vmul.f32 %v331, %v331
    %334 = vadd.xlane.f32.xlu0 %v332
    %v335 = vpop.xlane.xlu0 %334
    %336 = vadd.xlane.f32.xlu0 %v333
    %v337 = vpop.xlane.xlu0 %336
    %v338 = vmul.f32 %v335, %v103
    %v339 = vmul.f32 %v337, %v103
    %v340 = vadd.f32 %v338, 1e-05
    %v341 = vadd.f32 %v339, 1e-05
    %v342 = vrsqrt.pop %v340
    %v343 = vmul.f32 %v342, %v340
    %v344 = vmul.f32 %v343, %v342
    %v345 = vmul.f32 0.5, %v344
    %v346 = vsub.f32 1.5, %v345
    %v347 = vmul.f32 %v342, %v346
    %vm348 = vweird.f32 %v340
    %vm349 = vweird.f32 %v342
    %vm350 = vmor %vm348, %vm349
    %v351 = vsel %vm350, %v342, %v347
    %v352 = vrsqrt.pop %v341
    %v353 = vmul.f32 %v352, %v341
    %v354 = vmul.f32 %v353, %v352
    %v355 = vmul.f32 0.5, %v354
    %v356 = vsub.f32 1.5, %v355
    %v357 = vmul.f32 %v352, %v356
    %vm358 = vweird.f32 %v341
    %vm359 = vweird.f32 %v352
    %vm360 = vmor %vm358, %vm359
    %v361 = vsel %vm360, %v352, %v357
    %v362 = vmul.f32 %v330, %v351
    %v363 = vmul.f32 %v331, %v361
    %v365 = vperm.slane %v322, 0
    %v367 = vmul.f32 %v362, %v365
    %v368 = vmul.f32 %v363, %v365
    %v370 = vperm.slane %v323, 0
    %v372 = vadd.f32 %v367, %v370
    %v373 = vadd.f32 %v368, %v370
    %374 = vst [vmem:[#allocation2] sm:$0xff] %v372
    %375 = vst [vmem:[#allocation2 + $0x8] sm:$0xff] %v373
    // Predicated region
    $region50: #{encoder_layer.5} parent=1 // pred_check
      _
    $region51: #{encoder_layer.5} parent=1 // pred_check_branch
      %377 = sbr.rel (0) target = $region53
    $region52: #{encoder_layer.5} parent=1 // pred_region
      %379 = vsyncadd [#allocation3], 0
      %s380 = sshll.u32 [#allocation2], 4
      %s381 = int_to_ptr.vmem [resolvable:$true] %s380
      %s382 = sshll.u32 %s12, 4
      %s383 = int_to_ptr.hbm [resolvable:$true] %s382
      %388 = dma.vmem_to_hbm [thread:$0]  %s381, 256, %s383, [#allocation3], 128, 128, 8
    $region53: #{encoder_layer.5} parent=1 // pred_fallthru
      _
    // Predicated region
    $region54: #{encoder_layer.5} parent=1 // pred_check
      _
    $region55: #{encoder_layer.5} parent=1 // pred_check_branch
      %390 = sbr.rel (0) target = $region57
    $region56: #{encoder_layer.5} parent=1 // pred_region
      %392 = dma.done [#allocation3], 256
    $region57: #{encoder_layer.5} parent=1 // pred_fallthru
      _
    %393 = vsyncpa [#allocation3], 1

// kernel: encoder_layer.3
$region0: #{encoder_layer.3}
  #allocation0 [shape = 'u32[]', space=smem, size = 0x4, offset = 0x4, fixed_abs, tag = 'smem constant byte address 0x4 - core index']
  #allocation1 [shape = 'u32[72,128]{1,0:T(1,128)}', space=vmem, size = 0x9000, scoped, tag = 'internal scratch']
  %s0 = inlined_call_operand.vmem [shape: f32[16,128], index: 0, kind: input, shape index: {}]
  %s1 = inlined_call_operand.vmem [shape: f32[128,384], index: 1, kind: input, shape index: {}]
  %s2 = inlined_call_operand.vmem [shape: f32[1,384], index: 2, kind: input, shape index: {}]
  %s3 = inlined_call_operand.vmem [shape: f32[16,384], index: 3, kind: output, shape index: {}]
  %s4 = sld [smem:[#allocation0]]
  $region22: #{encoder_layer.3} parent=0
    _
  %s6 = ssub.s32 1, %s4
  %s7 = scalar_select 0, %s6, %s4
  // Predicated region
  $region2: #{encoder_layer.3} parent=0 // pred_check
    _
  $region3: #{encoder_layer.3} parent=0 // pred_check_branch
    %9 = sbr.rel (0) target = $region5
  $region4: #{encoder_layer.3} parent=0 // pred_region
    _
  $region5: #{encoder_layer.3} parent=0 // pred_fallthru
    _
  // Predicated region
  $region6: #{encoder_layer.3} parent=0 // pred_check
    _
  $region7: #{encoder_layer.3} parent=0 // pred_check_branch
    %11 = sbr.rel (0) target = $region9
  $region8: #{encoder_layer.3} parent=0 // pred_region
    _
  $region9: #{encoder_layer.3} parent=0 // pred_fallthru
    _
  // Predicated region
  $region10: #{encoder_layer.3} parent=0 // pred_check
    _
  $region11: #{encoder_layer.3} parent=0 // pred_check_branch
    %13 = sbr.rel (0) target = $region13
  $region12: #{encoder_layer.3} parent=0 // pred_region
    _
  $region13: #{encoder_layer.3} parent=0 // pred_fallthru
    _
  %v14 = vld [vmem:[%s0] sm:$0xff]
  %v15 = vld [vmem:[%s0 + $0x8] sm:$0xff]
  %v16 = vld [vmem:[%s1] sm:$0xff]
  %v17 = vld [vmem:[%s1 + $0x8] sm:$0xff]
  %v18 = vld [vmem:[%s1 + $0x10] sm:$0xff]
  %v19 = vld [vmem:[%s1 + $0x18] sm:$0xff]
  %v20 = vld [vmem:[%s1 + $0x20] sm:$0xff]
  %v21 = vld [vmem:[%s1 + $0x28] sm:$0xff]
  %v22 = vld [vmem:[%s1 + $0x30] sm:$0xff]
  %v23 = vld [vmem:[%s1 + $0x38] sm:$0xff]
  %v24 = vld [vmem:[%s1 + $0x40] sm:$0xff]
  %v25 = vld [vmem:[%s1 + $0x48] sm:$0xff]
  %v26 = vld [vmem:[%s1 + $0x50] sm:$0xff]
  %v27 = vld [vmem:[%s1 + $0x58] sm:$0xff]
  %v28 = vld [vmem:[%s1 + $0x60] sm:$0xff]
  %v29 = vld [vmem:[%s1 + $0x68] sm:$0xff]
  %v30 = vld [vmem:[%s1 + $0x70] sm:$0xff]
  %v31 = vld [vmem:[%s1 + $0x78] sm:$0xff]
  %v32 = vld [vmem:[%s1 + $0x80] sm:$0xff]
  %v33 = vld [vmem:[%s1 + $0x88] sm:$0xff]
  %v34 = vld [vmem:[%s1 + $0x90] sm:$0xff]
  %v35 = vld [vmem:[%s1 + $0x98] sm:$0xff]
  %v36 = vld [vmem:[%s1 + $0xa0] sm:$0xff]
  %v37 = vld [vmem:[%s1 + $0xa8] sm:$0xff]
  %v38 = vld [vmem:[%s1 + $0xb0] sm:$0xff]
  %v39 = vld [vmem:[%s1 + $0xb8] sm:$0xff]
  %v40 = vld [vmem:[%s1 + $0xc0] sm:$0xff]
  %v41 = vld [vmem:[%s1 + $0xc8] sm:$0xff]
  %v42 = vld [vmem:[%s1 + $0xd0] sm:$0xff]
  %v43 = vld [vmem:[%s1 + $0xd8] sm:$0xff]
  %v44 = vld [vmem:[%s1 + $0xe0] sm:$0xff]
  %v45 = vld [vmem:[%s1 + $0xe8] sm:$0xff]
  %v46 = vld [vmem:[%s1 + $0xf0] sm:$0xff]
  %v47 = vld [vmem:[%s1 + $0xf8] sm:$0xff]
  %v48 = vld [vmem:[%s1 + $0x100] sm:$0xff]
  %v49 = vld [vmem:[%s1 + $0x108] sm:$0xff]
  %v50 = vld [vmem:[%s1 + $0x110] sm:$0xff]
  %v51 = vld [vmem:[%s1 + $0x118] sm:$0xff]
  %v52 = vld [vmem:[%s1 + $0x120] sm:$0xff]
  %v53 = vld [vmem:[%s1 + $0x128] sm:$0xff]
  %v54 = vld [vmem:[%s1 + $0x130] sm:$0xff]
  %v55 = vld [vmem:[%s1 + $0x138] sm:$0xff]
  %v56 = vld [vmem:[%s1 + $0x140] sm:$0xff]
  %v57 = vld [vmem:[%s1 + $0x148] sm:$0xff]
  %v58 = vld [vmem:[%s1 + $0x150] sm:$0xff]
  %v59 = vld [vmem:[%s1 + $0x158] sm:$0xff]
  %v60 = vld [vmem:[%s1 + $0x160] sm:$0xff]
  %v61 = vld [vmem:[%s1 + $0x168] sm:$0xff]
  %v62 = vld [vmem:[%s1 + $0x170] sm:$0xff]
  %v63 = vld [vmem:[%s1 + $0x178] sm:$0xff]
  %v64 = vld [vmem:[%s2] sm:$0x7]
  %v66 = vperm.slane %v64, 0
  %v67 = vperm.slane %v64, 1
  %v68 = vperm.slane %v64, 2
  %72 = vmatpush.msra.mxu0 %v61
  %73 = vmatpush.msra.mxu0 %v58
  %74 = vmatpush.msra.mxu0 %v55
  %75 = vmatpush.msra.mxu0 %v52
  %76 = vmatpush.msra.mxu0 %v49
  %77 = vmatpush.msra.mxu0 %v46
  %78 = vmatpush.msra.mxu0 %v43
  %79 = vmatpush.msra.mxu0 %v40
  %80 = vmatpush.msra.mxu0 %v37
  %81 = vmatpush.msra.mxu0 %v34
  %82 = vmatpush.msra.mxu0 %v31
  %83 = vmatpush.msra.mxu0 %v28
  %84 = vmatpush.msra.mxu0 %v25
  %85 = vmatpush.msra.mxu0 %v22
  %86 = vmatpush.msra.mxu0 %v19
  %87 = vmatpush.msra.mxu0 %v16
  %88 = vmatmul.f32.gmra.mxu0 %v14
  %v89 = vpop.f32.mrf.mxu0
  %v90 = vadd.f32 %v66, %v89
  %91 = vmatmul.f32.gmra.mxu0 %v15
  %v92 = vpop.f32.mrf.mxu0
  %v93 = vadd.f32 %v66, %v92
  %94 = vdwg.mxu0
  %95 = vmatpush.msra.mxu0 %v62
  %96 = vmatpush.msra.mxu0 %v59
  %97 = vmatpush.msra.mxu0 %v56
  %98 = vmatpush.msra.mxu0 %v53
  %99 = vmatpush.msra.mxu0 %v50
  %100 = vmatpush.msra.mxu0 %v47
  %101 = vmatpush.msra.mxu0 %v44
  %102 = vmatpush.msra.mxu0 %v41
  %103 = vmatpush.msra.mxu0 %v38
  %104 = vmatpush.msra.mxu0 %v35
  %105 = vmatpush.msra.mxu0 %v32
  %106 = vmatpush.msra.mxu0 %v29
  %107 = vmatpush.msra.mxu0 %v26
  %108 = vmatpush.msra.mxu0 %v23
  %109 = vmatpush.msra.mxu0 %v20
  %110 = vmatpush.msra.mxu0 %v17
  %111 = vmatmul.f32.gmra.mxu0 %v14
  %v112 = vpop.f32.mrf.mxu0
  %v113 = vadd.f32 %v67, %v112
  %114 = vmatmul.f32.gmra.mxu0 %v15
  %v115 = vpop.f32.mrf.mxu0
  %v116 = vadd.f32 %v67, %v115
  %117 = vdwg.mxu0
  %118 = vmatpush.msra.mxu0 %v63
  %119 = vmatpush.msra.mxu0 %v60
  %120 = vmatpush.msra.mxu0 %v57
  %121 = vmatpush.msra.mxu0 %v54
  %122 = vmatpush.msra.mxu0 %v51
  %123 = vmatpush.msra.mxu0 %v48
  %124 = vmatpush.msra.mxu0 %v45
  %125 = vmatpush.msra.mxu0 %v42
  %126 = vmatpush.msra.mxu0 %v39
  %127 = vmatpush.msra.mxu0 %v36
  %128 = vmatpush.msra.mxu0 %v33
  %129 = vmatpush.msra.mxu0 %v30
  %130 = vmatpush.msra.mxu0 %v27
  %131 = vmatpush.msra.mxu0 %v24
  %132 = vmatpush.msra.mxu0 %v21
  %133 = vmatpush.msra.mxu0 %v18
  %134 = vmatmul.f32.gmra.mxu0 %v14
  %v135 = vpop.f32.mrf.mxu0
  %v136 = vadd.f32 %v68, %v135
  %137 = vmatmul.f32.gmra.mxu0 %v15
  %v138 = vpop.f32.mrf.mxu0
  %v139 = vadd.f32 %v68, %v138
  %140 = vdwg.mxu0
  %141 = vst [vmem:[%s3] sm:$0xff] %v90
  %142 = vst [vmem:[%s3 + $0x8] sm:$0xff] %v113
  %143 = vst [vmem:[%s3 + $0x10] sm:$0xff] %v136
  %144 = vst [vmem:[%s3 + $0x18] sm:$0xff] %v93
  %145 = vst [vmem:[%s3 + $0x20] sm:$0xff] %v116
  %146 = vst [vmem:[%s3 + $0x28] sm:$0xff] %v139
  // Predicated region
  $region14: #{encoder_layer.3} parent=0 // pred_check
    _
  $region15: #{encoder_layer.3} parent=0 // pred_check_branch
    %148 = sbr.rel (0) target = $region17
  $region16: #{encoder_layer.3} parent=0 // pred_region
    _
  $region17: #{encoder_layer.3} parent=0 // pred_fallthru
    _
  // Predicated region
  $region18: #{encoder_layer.3} parent=0 // pred_check
    _
  $region19: #{encoder_layer.3} parent=0 // pred_check_branch
    %150 = sbr.rel (0) target = $region21
  $region20: #{encoder_layer.3} parent=0 // pred_region
    _
  $region21: #{encoder_layer.3} parent=0 // pred_fallthru
    _

// kernel: encoder_layer.4
$region0: #{encoder_layer.4}
  #allocation0 [shape = 'u32[]', space=smem, size = 0x4, offset = 0x4, fixed_abs, tag = 'smem constant byte address 0x4 - core index']
  #allocation1 [shape = 'u32[72,128]{1,0:T(1,128)}', space=vmem, size = 0x9000, scoped, tag = 'internal scratch']
  %s0 = inlined_call_operand.vmem [shape: f32[8,8,32], index: 0, kind: input, shape index: {}]
  %s1 = inlined_call_operand.vmem [shape: f32[8,8,32], index: 1, kind: input, shape index: {}]
  %s2 = inlined_call_operand.vmem [shape: f32[8,8,32], index: 2, kind: input, shape index: {}]
  %s3 = inlined_call_operand.vmem [shape: f32[8,8,32], index: 3, kind: output, shape index: {0}]
  %s4 = inlined_call_operand.hbm [shape: f32[8,8,8], index: 4, kind: output, shape index: {1}]
  %5 = xla_tuple %s3, %s4
  %s6 = sld [smem:[#allocation0]]
  $region30: #{encoder_layer.4} parent=0
    _
  %s8 = ssub.s32 1, %s6
  %s9 = scalar_select 0, %s8, %s6
  $region1: #{encoder_layer.4} parent=0
    #allocation2 [shape = 'u8[32768]{0}', space=vmem, size = 0x8000, scoped, tag = 'output window, operand 1, single buffered']
    #allocation3 [shape = 's32[1]{0}', space=sflag, size = 0x4, scoped, tag = 'scoped memory for encoder_layer.4']
    %10 = vsyncpa [#allocation3], 0
    // Predicated region
    $region2: #{encoder_layer.4} parent=1 // pred_check
      _
    $region3: #{encoder_layer.4} parent=1 // pred_check_branch
      %12 = sbr.rel (0) target = $region5
    $region4: #{encoder_layer.4} parent=1 // pred_region
      _
    $region5: #{encoder_layer.4} parent=1 // pred_fallthru
      _
    // Predicated region
    $region6: #{encoder_layer.4} parent=1 // pred_check
      _
    $region7: #{encoder_layer.4} parent=1 // pred_check_branch
      %14 = sbr.rel (0) target = $region9
    $region8: #{encoder_layer.4} parent=1 // pred_region
      _
    $region9: #{encoder_layer.4} parent=1 // pred_fallthru
      _
    // Predicated region
    $region10: #{encoder_layer.4} parent=1 // pred_check
      _
    $region11: #{encoder_layer.4} parent=1 // pred_check_branch
      %16 = sbr.rel (0) target = $region13
    $region12: #{encoder_layer.4} parent=1 // pred_region
      _
    $region13: #{encoder_layer.4} parent=1 // pred_fallthru
      _
    %v17 = vld [vmem:[%s0] sm:$0xff]
    %v18 = vld [vmem:[%s0 + $0x8] sm:$0xff]
    %v19 = vld [vmem:[%s0 + $0x10] sm:$0xff]
    %v20 = vld [vmem:[%s0 + $0x18] sm:$0xff]
    %v21 = vld [vmem:[%s0 + $0x20] sm:$0xff]
    %v22 = vld [vmem:[%s0 + $0x28] sm:$0xff]
    %v23 = vld [vmem:[%s0 + $0x30] sm:$0xff]
    %v24 = vld [vmem:[%s0 + $0x38] sm:$0xff]
    %v25 = vld [vmem:[%s1] sm:$0xff]
    %v26 = vld [vmem:[%s1 + $0x8] sm:$0xff]
    %v27 = vld [vmem:[%s1 + $0x10] sm:$0xff]
    %v28 = vld [vmem:[%s1 + $0x18] sm:$0xff]
    %v29 = vld [vmem:[%s1 + $0x20] sm:$0xff]
    %v30 = vld [vmem:[%s1 + $0x28] sm:$0xff]
    %v31 = vld [vmem:[%s1 + $0x30] sm:$0xff]
    %v32 = vld [vmem:[%s1 + $0x38] sm:$0xff]
    %v33 = vld [vmem:[%s2] sm:$0xff]
    %v34 = vld [vmem:[%s2 + $0x8] sm:$0xff]
    %v35 = vld [vmem:[%s2 + $0x10] sm:$0xff]
    %v36 = vld [vmem:[%s2 + $0x18] sm:$0xff]
    %v37 = vld [vmem:[%s2 + $0x20] sm:$0xff]
    %v38 = vld [vmem:[%s2 + $0x28] sm:$0xff]
    %v39 = vld [vmem:[%s2 + $0x30] sm:$0xff]
    %v40 = vld [vmem:[%s2 + $0x38] sm:$0xff]
    %vm41 = vcmask 261120
    %v43 = vsel %vm41, %v17, 0
    %v46 = vsel %vm41, %v25, 0
    %48 = vmatpush.xpose.msra.mxu0 0.0
    %49 = vmatpush.xpose.msra.mxu0 0.0
    %50 = vmatpush.xpose.msra.mxu0 0.0
    %51 = vmatpush.xpose.msra.mxu0 0.0
    %52 = vmatpush.xpose.msra.mxu0 0.0
    %53 = vmatpush.xpose.msra.mxu0 0.0
    %54 = vmatpush.xpose.msra.mxu0 0.0
    %55 = vmatpush.xpose.msra.mxu0 0.0
    %56 = vmatpush.xpose.msra.mxu0 0.0
    %57 = vmatpush.xpose.msra.mxu0 0.0
    %58 = vmatpush.xpose.msra.mxu0 0.0
    %59 = vmatpush.xpose.msra.mxu0 0.0
    %60 = vmatpush.xpose.msra.mxu0 0.0
    %61 = vmatpush.xpose.msra.mxu0 0.0
    %62 = vmatpush.xpose.msra.mxu0 0.0
    %63 = vmatpush.xpose.msra.mxu0 %v46
    %64 = vmatmul.f32.gmra.mxu0 %v43
    %v65 = vpop.f32.mrf.mxu0
    %v66 = vadd.f32 0.0, %v65
    %67 = vdwg.mxu0
    %v69 = vsel %vm41, %v18, 0
    %v72 = vsel %vm41, %v26, 0
    %74 = vmatpush.xpose.msra.mxu0 0.0
    %75 = vmatpush.xpose.msra.mxu0 0.0
    %76 = vmatpush.xpose.msra.mxu0 0.0
    %77 = vmatpush.xpose.msra.mxu0 0.0
    %78 = vmatpush.xpose.msra.mxu0 0.0
    %79 = vmatpush.xpose.msra.mxu0 0.0
    %80 = vmatpush.xpose.msra.mxu0 0.0
    %81 = vmatpush.xpose.msra.mxu0 0.0
    %82 = vmatpush.xpose.msra.mxu0 0.0
    %83 = vmatpush.xpose.msra.mxu0 0.0
    %84 = vmatpush.xpose.msra.mxu0 0.0
    %85 = vmatpush.xpose.msra.mxu0 0.0
    %86 = vmatpush.xpose.msra.mxu0 0.0
    %87 = vmatpush.xpose.msra.mxu0 0.0
    %88 = vmatpush.xpose.msra.mxu0 0.0
    %89 = vmatpush.xpose.msra.mxu0 %v72
    %90 = vmatmul.f32.gmra.mxu0 %v69
    %v91 = vpop.f32.mrf.mxu0
    %v92 = vadd.f32 0.0, %v91
    %93 = vdwg.mxu0
    %v95 = vsel %vm41, %v19, 0
    %v98 = vsel %vm41, %v27, 0
    %100 = vmatpush.xpose.msra.mxu0 0.0
    %101 = vmatpush.xpose.msra.mxu0 0.0
    %102 = vmatpush.xpose.msra.mxu0 0.0
    %103 = vmatpush.xpose.msra.mxu0 0.0
    %104 = vmatpush.xpose.msra.mxu0 0.0
    %105 = vmatpush.xpose.msra.mxu0 0.0
    %106 = vmatpush.xpose.msra.mxu0 0.0
    %107 = vmatpush.xpose.msra.mxu0 0.0
    %108 = vmatpush.xpose.msra.mxu0 0.0
    %109 = vmatpush.xpose.msra.mxu0 0.0
    %110 = vmatpush.xpose.msra.mxu0 0.0
    %111 = vmatpush.xpose.msra.mxu0 0.0
    %112 = vmatpush.xpose.msra.mxu0 0.0
    %113 = vmatpush.xpose.msra.mxu0 0.0
    %114 = vmatpush.xpose.msra.mxu0 0.0
    %115 = vmatpush.xpose.msra.mxu0 %v98
    %116 = vmatmul.f32.gmra.mxu0 %v95
    %v117 = vpop.f32.mrf.mxu0
    %v118 = vadd.f32 0.0, %v117
    %119 = vdwg.mxu0
    %v121 = vsel %vm41, %v20, 0
    %v124 = vsel %vm41, %v28, 0
    %126 = vmatpush.xpose.msra.mxu0 0.0
    %127 = vmatpush.xpose.msra.mxu0 0.0
    %128 = vmatpush.xpose.msra.mxu0 0.0
    %129 = vmatpush.xpose.msra.mxu0 0.0
    %130 = vmatpush.xpose.msra.mxu0 0.0
    %131 = vmatpush.xpose.msra.mxu0 0.0
    %132 = vmatpush.xpose.msra.mxu0 0.0
    %133 = vmatpush.xpose.msra.mxu0 0.0
    %134 = vmatpush.xpose.msra.mxu0 0.0
    %135 = vmatpush.xpose.msra.mxu0 0.0
    %136 = vmatpush.xpose.msra.mxu0 0.0
    %137 = vmatpush.xpose.msra.mxu0 0.0
    %138 = vmatpush.xpose.msra.mxu0 0.0
    %139 = vmatpush.xpose.msra.mxu0 0.0
    %140 = vmatpush.xpose.msra.mxu0 0.0
    %141 = vmatpush.xpose.msra.mxu0 %v124
    %142 = vmatmul.f32.gmra.mxu0 %v121
    %v143 = vpop.f32.mrf.mxu0
    %v144 = vadd.f32 0.0, %v143
    %145 = vdwg.mxu0
    %v147 = vsel %vm41, %v21, 0
    %v150 = vsel %vm41, %v29, 0
    %152 = vmatpush.xpose.msra.mxu0 0.0
    %153 = vmatpush.xpose.msra.mxu0 0.0
    %154 = vmatpush.xpose.msra.mxu0 0.0
    %155 = vmatpush.xpose.msra.mxu0 0.0
    %156 = vmatpush.xpose.msra.mxu0 0.0
    %157 = vmatpush.xpose.msra.mxu0 0.0
    %158 = vmatpush.xpose.msra.mxu0 0.0
    %159 = vmatpush.xpose.msra.mxu0 0.0
    %160 = vmatpush.xpose.msra.mxu0 0.0
    %161 = vmatpush.xpose.msra.mxu0 0.0
    %162 = vmatpush.xpose.msra.mxu0 0.0
    %163 = vmatpush.xpose.msra.mxu0 0.0
    %164 = vmatpush.xpose.msra.mxu0 0.0
    %165 = vmatpush.xpose.msra.mxu0 0.0
    %166 = vmatpush.xpose.msra.mxu0 0.0
    %167 = vmatpush.xpose.msra.mxu0 %v150
    %168 = vmatmul.f32.gmra.mxu0 %v147
    %v169 = vpop.f32.mrf.mxu0
    %v170 = vadd.f32 0.0, %v169
    %171 = vdwg.mxu0
    %v173 = vsel %vm41, %v22, 0
    %v176 = vsel %vm41, %v30, 0
    %178 = vmatpush.xpose.msra.mxu0 0.0
    %179 = vmatpush.xpose.msra.mxu0 0.0
    %180 = vmatpush.xpose.msra.mxu0 0.0
    %181 = vmatpush.xpose.msra.mxu0 0.0
    %182 = vmatpush.xpose.msra.mxu0 0.0
    %183 = vmatpush.xpose.msra.mxu0 0.0
    %184 = vmatpush.xpose.msra.mxu0 0.0
    %185 = vmatpush.xpose.msra.mxu0 0.0
    %186 = vmatpush.xpose.msra.mxu0 0.0
    %187 = vmatpush.xpose.msra.mxu0 0.0
    %188 = vmatpush.xpose.msra.mxu0 0.0
    %189 = vmatpush.xpose.msra.mxu0 0.0
    %190 = vmatpush.xpose.msra.mxu0 0.0
    %191 = vmatpush.xpose.msra.mxu0 0.0
    %192 = vmatpush.xpose.msra.mxu0 0.0
    %193 = vmatpush.xpose.msra.mxu0 %v176
    %194 = vmatmul.f32.gmra.mxu0 %v173
    %v195 = vpop.f32.mrf.mxu0
    %v196 = vadd.f32 0.0, %v195
    %197 = vdwg.mxu0
    %v199 = vsel %vm41, %v23, 0
    %v202 = vsel %vm41, %v31, 0
    %204 = vmatpush.xpose.msra.mxu0 0.0
    %205 = vmatpush.xpose.msra.mxu0 0.0
    %206 = vmatpush.xpose.msra.mxu0 0.0
    %207 = vmatpush.xpose.msra.mxu0 0.0
    %208 = vmatpush.xpose.msra.mxu0 0.0
    %209 = vmatpush.xpose.msra.mxu0 0.0
    %210 = vmatpush.xpose.msra.mxu0 0.0
    %211 = vmatpush.xpose.msra.mxu0 0.0
    %212 = vmatpush.xpose.msra.mxu0 0.0
    %213 = vmatpush.xpose.msra.mxu0 0.0
    %214 = vmatpush.xpose.msra.mxu0 0.0
    %215 = vmatpush.xpose.msra.mxu0 0.0
    %216 = vmatpush.xpose.msra.mxu0 0.0
    %217 = vmatpush.xpose.msra.mxu0 0.0
    %218 = vmatpush.xpose.msra.mxu0 0.0
    %219 = vmatpush.xpose.msra.mxu0 %v202
    %220 = vmatmul.f32.gmra.mxu0 %v199
    %v221 = vpop.f32.mrf.mxu0
    %v222 = vadd.f32 0.0, %v221
    %223 = vdwg.mxu0
    %v225 = vsel %vm41, %v24, 0
    %v228 = vsel %vm41, %v32, 0
    %230 = vmatpush.xpose.msra.mxu0 0.0
    %231 = vmatpush.xpose.msra.mxu0 0.0
    %232 = vmatpush.xpose.msra.mxu0 0.0
    %233 = vmatpush.xpose.msra.mxu0 0.0
    %234 = vmatpush.xpose.msra.mxu0 0.0
    %235 = vmatpush.xpose.msra.mxu0 0.0
    %236 = vmatpush.xpose.msra.mxu0 0.0
    %237 = vmatpush.xpose.msra.mxu0 0.0
    %238 = vmatpush.xpose.msra.mxu0 0.0
    %239 = vmatpush.xpose.msra.mxu0 0.0
    %240 = vmatpush.xpose.msra.mxu0 0.0
    %241 = vmatpush.xpose.msra.mxu0 0.0
    %242 = vmatpush.xpose.msra.mxu0 0.0
    %243 = vmatpush.xpose.msra.mxu0 0.0
    %244 = vmatpush.xpose.msra.mxu0 0.0
    %245 = vmatpush.xpose.msra.mxu0 %v228
    %246 = vmatmul.f32.gmra.mxu0 %v225
    %v247 = vpop.f32.mrf.mxu0
    %v248 = vadd.f32 0.0, %v247
    %249 = vdwg.mxu0
    %vm250 = vcmask 64512
    %v251 = vsel %vm250, %v66, -inf
    %252 = vmax.xlane.f32.xlu0 %v251
    %v253 = vpop.xlane.xlu0 %252
    %v254 = vsel %vm250, %v92, -inf
    %255 = vmax.xlane.f32.xlu0 %v254
    %v256 = vpop.xlane.xlu0 %255
    %v257 = vsel %vm250, %v118, -inf
    %258 = vmax.xlane.f32.xlu0 %v257
    %v259 = vpop.xlane.xlu0 %258
    %v260 = vsel %vm250, %v144, -inf
    %261 = vmax.xlane.f32.xlu0 %v260
    %v262 = vpop.xlane.xlu0 %261
    %v263 = vsel %vm250, %v170, -inf
    %264 = vmax.xlane.f32.xlu0 %v263
    %v265 = vpop.xlane.xlu0 %264
    %v266 = vsel %vm250, %v196, -inf
    %267 = vmax.xlane.f32.xlu0 %v266
    %v268 = vpop.xlane.xlu0 %267
    %v269 = vsel %vm250, %v222, -inf
    %270 = vmax.xlane.f32.xlu0 %v269
    %v271 = vpop.xlane.xlu0 %270
    %v272 = vsel %vm250, %v248, -inf
    %273 = vmax.xlane.f32.xlu0 %v272
    %v274 = vpop.xlane.xlu0 %273
    %v275 = vsub.f32 %v66, %v253
    %v276 = vsub.f32 %v92, %v256
    %v277 = vsub.f32 %v118, %v259
    %v278 = vsub.f32 %v144, %v262
    %v279 = vsub.f32 %v170, %v265
    %v280 = vsub.f32 %v196, %v268
    %v281 = vsub.f32 %v222, %v271
    %v282 = vsub.f32 %v248, %v274
    %v283 = vmul.f32 %v275, 1.442695
    %v284 = vpow.pop %v283
    %v285 = vmul.f32 %v276, 1.442695
    %v286 = vpow.pop %v285
    %v287 = vmul.f32 %v277, 1.442695
    %v288 = vpow.pop %v287
    %v289 = vmul.f32 %v278, 1.442695
    %v290 = vpow.pop %v289
    %v291 = vmul.f32 %v279, 1.442695
    %v292 = vpow.pop %v291
    %v293 = vmul.f32 %v280, 1.442695
    %v294 = vpow.pop %v293
    %v295 = vmul.f32 %v281, 1.442695
    %v296 = vpow.pop %v295
    %v297 = vmul.f32 %v282, 1.442695
    %v298 = vpow.pop %v297
    %v299 = vsel %vm250, %v284, 0.0
    %300 = vadd.xlane.f32.xlu0 %v299
    %v301 = vpop.xlane.xlu0 %300
    %v302 = vsel %vm250, %v286, 0.0
    %303 = vadd.xlane.f32.xlu0 %v302
    %v304 = vpop.xlane.xlu0 %303
    %v305 = vsel %vm250, %v288, 0.0
    %306 = vadd.xlane.f32.xlu0 %v305
    %v307 = vpop.xlane.xlu0 %306
    %v308 = vsel %vm250, %v290, 0.0
    %309 = vadd.xlane.f32.xlu0 %v308
    %v310 = vpop.xlane.xlu0 %309
    %v311 = vsel %vm250, %v292, 0.0
    %312 = vadd.xlane.f32.xlu0 %v311
    %v313 = vpop.xlane.xlu0 %312
    %v314 = vsel %vm250, %v294, 0.0
    %315 = vadd.xlane.f32.xlu0 %v314
    %v316 = vpop.xlane.xlu0 %315
    %v317 = vsel %vm250, %v296, 0.0
    %318 = vadd.xlane.f32.xlu0 %v317
    %v319 = vpop.xlane.xlu0 %318
    %v320 = vsel %vm250, %v298, 0.0
    %321 = vadd.xlane.f32.xlu0 %v320
    %v322 = vpop.xlane.xlu0 %321
    %v323 = vrcp.pop %v301
    %v324 = vrcp.pop %v304
    %v325 = vrcp.pop %v307
    %v326 = vrcp.pop %v310
    %v327 = vrcp.pop %v313
    %v328 = vrcp.pop %v316
    %v329 = vrcp.pop %v319
    %v330 = vrcp.pop %v322
    %v331 = vmul.f32 %v284, %v323
    %v332 = vmul.f32 %v286, %v324
    %v333 = vmul.f32 %v288, %v325
    %v334 = vmul.f32 %v290, %v326
    %v335 = vmul.f32 %v292, %v327
    %v336 = vmul.f32 %v294, %v328
    %v337 = vmul.f32 %v296, %v329
    %v338 = vmul.f32 %v298, %v330
    %339 = vst.msk [vmem:[#allocation2] sm:$0xff] %vm250, %v331
    %340 = vst.msk [vmem:[#allocation2 + $0x8] sm:$0xff] %vm250, %v332
    %341 = vst.msk [vmem:[#allocation2 + $0x10] sm:$0xff] %vm250, %v333
    %342 = vst.msk [vmem:[#allocation2 + $0x18] sm:$0xff] %vm250, %v334
    %343 = vst.msk [vmem:[#allocation2 + $0x20] sm:$0xff] %vm250, %v335
    %344 = vst.msk [vmem:[#allocation2 + $0x28] sm:$0xff] %vm250, %v336
    %345 = vst.msk [vmem:[#allocation2 + $0x30] sm:$0xff] %vm250, %v337
    %346 = vst.msk [vmem:[#allocation2 + $0x38] sm:$0xff] %vm250, %v338
    %v348 = vsel %vm250, %v331, 0
    %350 = vmatpush.msra.mxu0 0.0
    %351 = vmatpush.msra.mxu0 0.0
    %352 = vmatpush.msra.mxu0 0.0
    %353 = vmatpush.msra.mxu0 0.0
    %354 = vmatpush.msra.mxu0 0.0
    %355 = vmatpush.msra.mxu0 0.0
    %356 = vmatpush.msra.mxu0 0.0
    %357 = vmatpush.msra.mxu0 0.0
    %358 = vmatpush.msra.mxu0 0.0
    %359 = vmatpush.msra.mxu0 0.0
    %360 = vmatpush.msra.mxu0 0.0
    %361 = vmatpush.msra.mxu0 0.0
    %362 = vmatpush.msra.mxu0 0.0
    %363 = vmatpush.msra.mxu0 0.0
    %364 = vmatpush.msra.mxu0 0.0
    %365 = vmatpush.msra.mxu0 %v33
    %366 = vmatmul.f32.gmra.mxu0 %v348
    %v367 = vpop.f32.mrf.mxu0
    %v368 = vadd.f32 0.0, %v367
    %369 = vdwg.mxu0
    %v371 = vsel %vm250, %v332, 0
    %373 = vmatpush.msra.mxu0 0.0
    %374 = vmatpush.msra.mxu0 0.0
    %375 = vmatpush.msra.mxu0 0.0
    %376 = vmatpush.msra.mxu0 0.0
    %377 = vmatpush.msra.mxu0 0.0
    %378 = vmatpush.msra.mxu0 0.0
    %379 = vmatpush.msra.mxu0 0.0
    %380 = vmatpush.msra.mxu0 0.0
    %381 = vmatpush.msra.mxu0 0.0
    %382 = vmatpush.msra.mxu0 0.0
    %383 = vmatpush.msra.mxu0 0.0
    %384 = vmatpush.msra.mxu0 0.0
    %385 = vmatpush.msra.mxu0 0.0
    %386 = vmatpush.msra.mxu0 0.0
    %387 = vmatpush.msra.mxu0 0.0
    %388 = vmatpush.msra.mxu0 %v34
    %389 = vmatmul.f32.gmra.mxu0 %v371
    %v390 = vpop.f32.mrf.mxu0
    %v391 = vadd.f32 0.0, %v390
    %392 = vdwg.mxu0
    %v394 = vsel %vm250, %v333, 0
    %396 = vmatpush.msra.mxu0 0.0
    %397 = vmatpush.msra.mxu0 0.0
    %398 = vmatpush.msra.mxu0 0.0
    %399 = vmatpush.msra.mxu0 0.0
    %400 = vmatpush.msra.mxu0 0.0
    %401 = vmatpush.msra.mxu0 0.0
    %402 = vmatpush.msra.mxu0 0.0
    %403 = vmatpush.msra.mxu0 0.0
    %404 = vmatpush.msra.mxu0 0.0
    %405 = vmatpush.msra.mxu0 0.0
    %406 = vmatpush.msra.mxu0 0.0
    %407 = vmatpush.msra.mxu0 0.0
    %408 = vmatpush.msra.mxu0 0.0
    %409 = vmatpush.msra.mxu0 0.0
    %410 = vmatpush.msra.mxu0 0.0
    %411 = vmatpush.msra.mxu0 %v35
    %412 = vmatmul.f32.gmra.mxu0 %v394
    %v413 = vpop.f32.mrf.mxu0
    %v414 = vadd.f32 0.0, %v413
    %415 = vdwg.mxu0
    %v417 = vsel %vm250, %v334, 0
    %419 = vmatpush.msra.mxu0 0.0
    %420 = vmatpush.msra.mxu0 0.0
    %421 = vmatpush.msra.mxu0 0.0
    %422 = vmatpush.msra.mxu0 0.0
    %423 = vmatpush.msra.mxu0 0.0
    %424 = vmatpush.msra.mxu0 0.0
    %425 = vmatpush.msra.mxu0 0.0
    %426 = vmatpush.msra.mxu0 0.0
    %427 = vmatpush.msra.mxu0 0.0
    %428 = vmatpush.msra.mxu0 0.0
    %429 = vmatpush.msra.mxu0 0.0
    %430 = vmatpush.msra.mxu0 0.0
    %431 = vmatpush.msra.mxu0 0.0
    %432 = vmatpush.msra.mxu0 0.0
    %433 = vmatpush.msra.mxu0 0.0
    %434 = vmatpush.msra.mxu0 %v36
    %435 = vmatmul.f32.gmra.mxu0 %v417
    %v436 = vpop.f32.mrf.mxu0
    %v437 = vadd.f32 0.0, %v436
    %438 = vdwg.mxu0
    %v440 = vsel %vm250, %v335, 0
    %442 = vmatpush.msra.mxu0 0.0
    %443 = vmatpush.msra.mxu0 0.0
    %444 = vmatpush.msra.mxu0 0.0
    %445 = vmatpush.msra.mxu0 0.0
    %446 = vmatpush.msra.mxu0 0.0
    %447 = vmatpush.msra.mxu0 0.0
    %448 = vmatpush.msra.mxu0 0.0
    %449 = vmatpush.msra.mxu0 0.0
    %450 = vmatpush.msra.mxu0 0.0
    %451 = vmatpush.msra.mxu0 0.0
    %452 = vmatpush.msra.mxu0 0.0
    %453 = vmatpush.msra.mxu0 0.0
    %454 = vmatpush.msra.mxu0 0.0
    %455 = vmatpush.msra.mxu0 0.0
    %456 = vmatpush.msra.mxu0 0.0
    %457 = vmatpush.msra.mxu0 %v37
    %458 = vmatmul.f32.gmra.mxu0 %v440
    %v459 = vpop.f32.mrf.mxu0
    %v460 = vadd.f32 0.0, %v459
    %461 = vdwg.mxu0
    %v463 = vsel %vm250, %v336, 0
    %465 = vmatpush.msra.mxu0 0.0
    %466 = vmatpush.msra.mxu0 0.0
    %467 = vmatpush.msra.mxu0 0.0
    %468 = vmatpush.msra.mxu0 0.0
    %469 = vmatpush.msra.mxu0 0.0
    %470 = vmatpush.msra.mxu0 0.0
    %471 = vmatpush.msra.mxu0 0.0
    %472 = vmatpush.msra.mxu0 0.0
    %473 = vmatpush.msra.mxu0 0.0
    %474 = vmatpush.msra.mxu0 0.0
    %475 = vmatpush.msra.mxu0 0.0
    %476 = vmatpush.msra.mxu0 0.0
    %477 = vmatpush.msra.mxu0 0.0
    %478 = vmatpush.msra.mxu0 0.0
    %479 = vmatpush.msra.mxu0 0.0
    %480 = vmatpush.msra.mxu0 %v38
    %481 = vmatmul.f32.gmra.mxu0 %v463
    %v482 = vpop.f32.mrf.mxu0
    %v483 = vadd.f32 0.0, %v482
    %484 = vdwg.mxu0
    %v486 = vsel %vm250, %v337, 0
    %488 = vmatpush.msra.mxu0 0.0
    %489 = vmatpush.msra.mxu0 0.0
    %490 = vmatpush.msra.mxu0 0.0
    %491 = vmatpush.msra.mxu0 0.0
    %492 = vmatpush.msra.mxu0 0.0
    %493 = vmatpush.msra.mxu0 0.0
    %494 = vmatpush.msra.mxu0 0.0
    %495 = vmatpush.msra.mxu0 0.0
    %496 = vmatpush.msra.mxu0 0.0
    %497 = vmatpush.msra.mxu0 0.0
    %498 = vmatpush.msra.mxu0 0.0
    %499 = vmatpush.msra.mxu0 0.0
    %500 = vmatpush.msra.mxu0 0.0
    %501 = vmatpush.msra.mxu0 0.0
    %502 = vmatpush.msra.mxu0 0.0
    %503 = vmatpush.msra.mxu0 %v39
    %504 = vmatmul.f32.gmra.mxu0 %v486
    %v505 = vpop.f32.mrf.mxu0
    %v506 = vadd.f32 0.0, %v505
    %507 = vdwg.mxu0
    %v509 = vsel %vm250, %v338, 0
    %511 = vmatpush.msra.mxu0 0.0
    %512 = vmatpush.msra.mxu0 0.0
    %513 = vmatpush.msra.mxu0 0.0
    %514 = vmatpush.msra.mxu0 0.0
    %515 = vmatpush.msra.mxu0 0.0
    %516 = vmatpush.msra.mxu0 0.0
    %517 = vmatpush.msra.mxu0 0.0
    %518 = vmatpush.msra.mxu0 0.0
    %519 = vmatpush.msra.mxu0 0.0
    %520 = vmatpush.msra.mxu0 0.0
    %521 = vmatpush.msra.mxu0 0.0
    %522 = vmatpush.msra.mxu0 0.0
    %523 = vmatpush.msra.mxu0 0.0
    %524 = vmatpush.msra.mxu0 0.0
    %525 = vmatpush.msra.mxu0 0.0
    %526 = vmatpush.msra.mxu0 %v40
    %527 = vmatmul.f32.gmra.mxu0 %v509
    %v528 = vpop.f32.mrf.mxu0
    %v529 = vadd.f32 0.0, %v528
    %530 = vdwg.mxu0
    %531 = vst.msk [vmem:[%s3] sm:$0xff] %vm41, %v368
    %532 = vst.msk [vmem:[%s3 + $0x8] sm:$0xff] %vm41, %v391
    %533 = vst.msk [vmem:[%s3 + $0x10] sm:$0xff] %vm41, %v414
    %534 = vst.msk [vmem:[%s3 + $0x18] sm:$0xff] %vm41, %v437
    %535 = vst.msk [vmem:[%s3 + $0x20] sm:$0xff] %vm41, %v460
    %536 = vst.msk [vmem:[%s3 + $0x28] sm:$0xff] %vm41, %v483
    %537 = vst.msk [vmem:[%s3 + $0x30] sm:$0xff] %vm41, %v506
    %538 = vst.msk [vmem:[%s3 + $0x38] sm:$0xff] %vm41, %v529
    // Predicated region
    $region14: #{encoder_layer.4} parent=1 // pred_check
      _
    $region15: #{encoder_layer.4} parent=1 // pred_check_branch
      %540 = sbr.rel (0) target = $region17
    $region16: #{encoder_layer.4} parent=1 // pred_region
      _
    $region17: #{encoder_layer.4} parent=1 // pred_fallthru
      _
    // Predicated region
    $region18: #{encoder_layer.4} parent=1 // pred_check
      _
    $region19: #{encoder_layer.4} parent=1 // pred_check_branch
      %542 = sbr.rel (0) target = $region21
    $region20: #{encoder_layer.4} parent=1 // pred_region
      %544 = vsyncadd [#allocation3], 0
      %s545 = sshll.u32 [#allocation2], 4
      %s546 = int_to_ptr.vmem [resolvable:$true] %s545
      %s547 = sshll.u32 %s4, 4
      %s548 = int_to_ptr.hbm [resolvable:$true] %s547
      %553 = dma.vmem_to_hbm [thread:$0]  %s546, 1024, %s548, [#allocation3], 128, 128, 8
    $region21: #{encoder_layer.4} parent=1 // pred_fallthru
      _
    // Predicated region
    $region22: #{encoder_layer.4} parent=1 // pred_check
      _
    $region23: #{encoder_layer.4} parent=1 // pred_check_branch
      %555 = sbr.rel (0) target = $region25
    $region24: #{encoder_layer.4} parent=1 // pred_region
      _
    $region25: #{encoder_layer.4} parent=1 // pred_fallthru
      _
    // Predicated region
    $region26: #{encoder_layer.4} parent=1 // pred_check
      _
    $region27: #{encoder_layer.4} parent=1 // pred_check_branch
      %557 = sbr.rel (0) target = $region29
    $region28: #{encoder_layer.4} parent=1 // pred_region
      %559 = dma.done [#allocation3], 1024
    $region29: #{encoder_layer.4} parent=1 // pred_fallthru
      _
    %560 = vsyncpa [#allocation3], 1

</llo_original>
